<compile_context>
chip_gen: v6e
topology: v6e:2x2x1
jax: 0.10.0
libtpu: 0.0.40
codegen_flags: <defaults>
</compile_context>

<pallas_src>
import jax
import jax.numpy as jnp
import numpy as np
from jax import lax
from jax.experimental import pallas as pl
from jax.experimental.pallas import tpu as pltpu

LANE = 128  # TPU vreg lane width


# --------------------------------- kernel -----------------------------------

def _gru_seq_kernel(x_ref, h0_ref, w_ref, b_ref, out_ref):
    """Run T GRU steps for B sequences in one invocation (no grid).

    x_ref:   (T, B, P)  pre-gathered, lane-padded embedding rows
    h0_ref:  (B, P)     initial hidden; pad lanes MUST be zero (see wrapper)
    w_ref:   (2P, 4P)   fused block-structured GRU weights [x | h] -> [r|z|i_n|h_n]
    b_ref:   (1, 4P)    fused biases (r/z pre-summed), f32
    out_ref: (T, B, P)  per-step hidden states (VMEM-resident; one HBM writeback)
    """
    T = x_ref.shape[0]
    P = h0_ref.shape[-1]

    bias = b_ref[...]                           # (1, 4P) f32, hoisted out of the loop
    h0 = h0_ref[...].astype(jnp.float32)        # (B, P)

    def step(t, h):
        x = x_ref[t].astype(jnp.float32)        # (B, P), pad lanes are 0
        xh = jnp.concatenate([x, h], axis=-1)   # (B, 2P): two lane-aligned groups
        # One MXU push producing all four lane-aligned (P-wide) gate panels.
        g = jnp.dot(xh.astype(w_ref.dtype), w_ref[...],
                    preferred_element_type=jnp.float32) + bias      # (B, 4P) f32
        r = jax.nn.sigmoid(g[:, 0 * P:1 * P])                       # i_r + h_r (+ folded b)
        z = jax.nn.sigmoid(g[:, 1 * P:2 * P])                       # i_z + h_z (+ folded b)
        n = jnp.tanh(g[:, 2 * P:3 * P] + r * g[:, 3 * P:4 * P])     # i_n + r * h_n
        # Pad-lane invariant: g_pad = 0 => z_pad = 0.5, n_pad = 0, so
        # h_new_pad = 0.5 * h_pad.  Because h0 pad lanes are 0, they stay 0.
        h_new = (1.0 - z) * n + z * h                                # (B, P)
        out_ref[t] = h_new                       # store to VMEM-resident output
        return h_new

    lax.fori_loop(0, T, step, h0, unroll=(T <= 16))


# ------------------------------ host packing --------------------------------

def build_fused_params(params, weight_dtype=jnp.float32):
    """Pack (emb, W_ih^T, W_hh^T, b_ih, b_hh) into the fused kernel layout.

    Returns (emb_padded (V, P), W_fused (2P, 4P), b_fused (1, 4P) f32).
    """
    emb, w_ih_t, w_hh_t, b_ih, b_hh = params
    V, H = emb.shape
    P = ((H + LANE - 1) // LANE) * LANE  # lane-aligned gate-panel width (>= 128)

    emb_p = jnp.zeros((V, P), jnp.float32).at[:, :H].set(emb)

    w = jnp.zeros((2 * P, 4 * P), jnp.float32)
    # r gate: summed contribution of x (rows 0:H) and h (rows P:P+H)
    w = w.at[0:H,     0:H].set(w_ih_t[:, 0:H])
    w = w.at[P:P + H, 0:H].set(w_hh_t[:, 0:H])
    # z gate
    w = w.at[0:H,     P:P + H].set(w_ih_t[:, H:2 * H])
    w = w.at[P:P + H, P:P + H].set(w_hh_t[:, H:2 * H])
    # i_n: x only
    w = w.at[0:H,     2 * P:2 * P + H].set(w_ih_t[:, 2 * H:3 * H])
    # h_n: h only (kept separate because of r * h_n)
    w = w.at[P:P + H, 3 * P:3 * P + H].set(w_hh_t[:, 2 * H:3 * H])

    b = jnp.zeros((1, 4 * P), jnp.float32)
    b = b.at[0, 0:H].set(b_ih[0:H] + b_hh[0:H])                  # r (folded)
    b = b.at[0, P:P + H].set(b_ih[H:2 * H] + b_hh[H:2 * H])      # z (folded)
    b = b.at[0, 2 * P:2 * P + H].set(b_ih[2 * H:3 * H])          # i_n
    b = b.at[0, 3 * P:3 * P + H].set(b_hh[2 * H:3 * H])          # h_n

    return emb_p.astype(weight_dtype), w.astype(weight_dtype), b  # bias stays f32


# --------------------------------- wrappers ----------------------------------

def _run_gru_seq(tok_tb, h0_bh, kernel_params):
    """tok_tb: (T, B) int32 (already clamped); h0_bh: (B, H).
    Returns (T, B, P) f32 padded hidden states."""
    emb_p, w_fused, b_fused = kernel_params
    V, P = emb_p.shape
    T, B = tok_tb.shape
    H = h0_bh.shape[-1]

    # Wrapper-side gather: one lane-dense (T, B, P) slab instead of T tiny DMAs.
    x = jnp.take(emb_p, tok_tb, axis=0)                              # (T, B, P)

    # Initial hidden with ZERO pad lanes (required by the kernel's pad invariant).
    h0 = jnp.zeros((B, P), jnp.float32).at[:, :H].set(h0_bh.astype(jnp.float32))

    nbytes = lambda a: a.size * a.dtype.itemsize
    resident = nbytes(x) + nbytes(h0) + nbytes(w_fused) + nbytes(b_fused) + T * B * P * 4
    vmem_limit = int(min(max(2 * resident + (1 << 20), 16 << 20), 100 << 20))

    vmem = pltpu.MemorySpace.VMEM
    out = pl.pallas_call(
        _gru_seq_kernel,
        out_shape=jax.ShapeDtypeStruct((T, B, P), jnp.float32),
        in_specs=[pl.BlockSpec(memory_space=vmem)] * 4,   # whole arrays, single-buffered
        out_specs=pl.BlockSpec(memory_space=vmem),
        compiler_params=pltpu.CompilerParams(vmem_limit_bytes=vmem_limit),
    )(x, h0, w_fused, b_fused)
    return out


def encoder_rnn_forward_seq(tokens, hidden0, kernel_params):
    """T encoder steps for one sequence (module layout).

    tokens: (T,) int32; hidden0: (1,1,H) f32.
    Returns (outputs (T,1,H) f32, final hidden (1,1,H) f32).
    """
    emb_p, _, _ = kernel_params
    H = hidden0.shape[-1]
    T = int(tokens.shape[0])
    tok = jnp.clip(jnp.asarray(tokens, jnp.int32).reshape(T, 1), 0, emb_p.shape[0] - 1)
    out_p = _run_gru_seq(tok, hidden0.reshape(1, H), kernel_params)   # (T, 1, P)
    outputs = out_p[:, :, :H]                                          # (T, 1, H)
    hidden = outputs[T - 1].reshape(1, 1, H)   # GRU: final hidden == last output
    return outputs, hidden


def encoder_rnn_forward_batched(tokens_bt, hidden0_bh, kernel_params):
    """B sequences stepped together along the MXU M dim.

    tokens_bt: (B, T) int32; hidden0_bh: (B, H).
    Returns (outputs (T, B, H), final hidden (B, H)).
    """
    emb_p, _, _ = kernel_params
    B, T = tokens_bt.shape
    H = hidden0_bh.shape[-1]
    tok = jnp.clip(jnp.asarray(tokens_bt, jnp.int32).T, 0, emb_p.shape[0] - 1)  # (T, B)
    out_p = _run_gru_seq(tok, hidden0_bh, kernel_params)              # (T, B, P)
    outputs = out_p[:, :, :H]
    return outputs, outputs[T - 1]


def encoder_rnn_forward(token, hidden, kernel_params, use_pallas=False):
    """Module-equivalent single-step forward: token () int32, hidden (1,1,H).

    Default is plain XLA: a single T=1 step through pallas_call is dominated by
    launch/DMA fixed costs (perf review).  Set use_pallas=True to route the step
    through the sequence kernel anyway.
    """
    if use_pallas:
        outs, hid = encoder_rnn_forward_seq(
            jnp.asarray(token, jnp.int32).reshape((1,)), hidden, kernel_params)
        return outs.reshape(1, 1, -1), hid

    emb_p, w_fused, b_fused = kernel_params
    H = hidden.shape[-1]
    P = emb_p.shape[-1]
    tok = jnp.clip(jnp.asarray(token, jnp.int32).reshape(()), 0, emb_p.shape[0] - 1)
    x = emb_p[tok].astype(jnp.float32).reshape(1, P)
    h = jnp.zeros((1, P), jnp.float32).at[:, :H].set(
        hidden.reshape(1, H).astype(jnp.float32))
    xh = jnp.concatenate([x, h], axis=-1)
    g = jnp.dot(xh.astype(w_fused.dtype), w_fused,
                preferred_element_type=jnp.float32) + b_fused
    r = jax.nn.sigmoid(g[:, 0 * P:1 * P])
    z = jax.nn.sigmoid(g[:, 1 * P:2 * P])
    n = jnp.tanh(g[:, 2 * P:3 * P] + r * g[:, 3 * P:4 * P])
    h_new = (1.0 - z) * n + z * h
    out = h_new[:, :H].reshape(1, 1, H)
    return out, out


# ----------------------------- pure-JAX reference ----------------------------

def _reference_seq(tokens, hidden0, params):
    """Pure-JAX f32 reference of EncoderRNN applied over a token sequence."""
    emb, w_ih_t, w_hh_t, b_ih, b_hh = params
    H = emb.shape[1]
    h = hidden0.reshape(1, H).astype(jnp.float32)
    outs = []
    for t in range(int(tokens.shape[0])):
        x = emb[tokens[t]].reshape(1, H)
        gi = x @ w_ih_t + b_ih
        gh = h @ w_hh_t + b_hh
        i_r, i_z, i_n = gi[:, :H], gi[:, H:2 * H], gi[:, 2 * H:]
        h_r, h_z, h_n = gh[:, :H], gh[:, H:2 * H], gh[:, 2 * H:]
        r = jax.nn.sigmoid(i_r + h_r)
        z = jax.nn.sigmoid(i_z + h_z)
        n = jnp.tanh(i_n + r * h_n)
        h = (1.0 - z) * n + z * h
        outs.append(h)
    return jnp.stack(outs, axis=0), h.reshape(1, 1, H)


def init_params(key, n_words, hidden_size):
    """Synthetic parameters matching nn.Embedding + nn.GRU shapes (W stored transposed)."""
    H = hidden_size
    k_emb, k_wih, k_whh, k_bih, k_bhh = jax.random.split(key, 5)
    bound = 1.0 / np.sqrt(H)
    emb = jax.random.normal(k_emb, (n_words, H), dtype=jnp.float32)             # nn.Embedding: N(0,1)
    w_ih_t = jax.random.uniform(k_wih, (H, 3 * H), jnp.float32, -bound, bound)  # W_ih^T, gates [r|z|n]
    w_hh_t = jax.random.uniform(k_whh, (H, 3 * H), jnp.float32, -bound, bound)  # W_hh^T
    b_ih = jax.random.uniform(k_bih, (3 * H,), jnp.float32, -bound, bound)
    b_hh = jax.random.uniform(k_bhh, (3 * H,), jnp.float32, -bound, bound)
    return emb, w_ih_t, w_hh_t, b_ih, b_hh


if __name__ == "__main__":
    N_WORDS = 40      # lang.n_words (synthetic vocab)
    HIDDEN = 32       # hidden_size
    SEQ = 8           # timesteps processed inside one pallas_call
    BATCH = 2         # sequences stepped together along the MXU M dim

    key = jax.random.PRNGKey(0)
    k_params, k_tok, k_tokb = jax.random.split(key, 3)
    params = init_params(k_params, N_WORDS, HIDDEN)
    tokens = jax.random.randint(k_tok, (SEQ,), 0, N_WORDS, dtype=jnp.int32)
    hidden0 = jnp.zeros((1, 1, HIDDEN), dtype=jnp.float32)   # initHidden

    # f32 weight storage: exact PyTorch-GRU semantics (default; recommended on v5e).
    kparams_f32 = build_fused_params(params, weight_dtype=jnp.float32)

    ref_outs, ref_hid = _reference_seq(tokens, hidden0, params)

    # --- single-step (module forward signature): XLA fallback + Pallas path ---
    out1, hid1 = encoder_rnn_forward(tokens[0], hidden0, kparams_f32)
    out1 = jax.block_until_ready(out1)
    assert out1.shape == (1, 1, HIDDEN) and hid1.shape == (1, 1, HIDDEN)
    np.testing.assert_allclose(np.asarray(out1), np.asarray(ref_outs[0:1].reshape(1, 1, HIDDEN)),
                               rtol=1e-4, atol=1e-4)
    out1p, hid1p = encoder_rnn_forward(tokens[0], hidden0, kparams_f32, use_pallas=True)
    out1p = jax.block_until_ready(out1p)
    np.testing.assert_allclose(np.asarray(out1p),
                               np.asarray(ref_outs[0:1].reshape(1, 1, HIDDEN)),
                               rtol=1e-4, atol=1e-4)

    # --- full sequence: single pallas_call, in-kernel time loop ---
    outs, hid = encoder_rnn_forward_seq(tokens, hidden0, kparams_f32)
    outs = jax.block_until_ready(outs)
    hid = jax.block_until_ready(hid)
    np.testing.assert_allclose(np.asarray(outs), np.asarray(ref_outs), rtol=1e-4, atol=1e-4)
    np.testing.assert_allclose(np.asarray(hid), np.asarray(ref_hid), rtol=1e-4, atol=1e-4)

    # --- batched sequences (B along MXU M dim) ---
    tokens_bt = jax.random.randint(k_tokb, (BATCH, SEQ), 0, N_WORDS, dtype=jnp.int32)
    hidden0_b = jnp.zeros((BATCH, HIDDEN), dtype=jnp.float32)
    outs_b, hid_b = encoder_rnn_forward_batched(tokens_bt, hidden0_b, kparams_f32)
    outs_b = jax.block_until_ready(outs_b)
    hid_b = jax.block_until_ready(hid_b)
    for b in range(BATCH):
        r_o, r_h = _reference_seq(tokens_bt[b], hidden0_b[b].reshape(1, 1, HIDDEN), params)
        np.testing.assert_allclose(np.asarray(outs_b[:, b:b + 1, :]), np.asarray(r_o),
                                   rtol=1e-4, atol=1e-4)
        np.testing.assert_allclose(np.asarray(hid_b[b].reshape(1, 1, HIDDEN)),
                                   np.asarray(r_h), rtol=1e-4, atol=1e-4)

    # --- bf16 weight/embedding storage (v6e/v7x DMA + VMEM saving); gate math stays f32 ---
    kparams_bf16 = build_fused_params(params, weight_dtype=jnp.bfloat16)
    outs_bf, _ = encoder_rnn_forward_seq(tokens, hidden0, kparams_bf16)
    outs_bf = jax.block_until_ready(outs_bf)
    np.testing.assert_allclose(np.asarray(outs_bf), np.asarray(ref_outs), rtol=5e-2, atol=5e-2)

    print("KERNEL_OK")
</pallas_src>

<mosaic_0001>
module attributes {stable_mosaic.version = 11 : i64} {
  func.func @_gru_seq_kernel(%arg0: memref<1x1x128xf32, #tpu.memory_space<vmem>>, %arg1: memref<1x128xf32, #tpu.memory_space<vmem>>, %arg2: memref<256x512xf32, #tpu.memory_space<vmem>>, %arg3: memref<1x512xf32, #tpu.memory_space<vmem>>, %arg4: memref<1x1x128xf32, #tpu.memory_space<vmem>>) attributes {dimension_semantics = [], scalar_prefetch = 0 : i64, scratch_operands = 0 : i64, tpu.core_type = #tpu.core_type<tc>} {
    %c0 = arith.constant 0 : index
    %c0_0 = arith.constant 0 : index
    %0 = vector.load %arg3[%c0, %c0_0] : memref<1x512xf32, #tpu.memory_space<vmem>>, vector<1x512xf32>
    %c0_1 = arith.constant 0 : index
    %c0_2 = arith.constant 0 : index
    %1 = vector.load %arg1[%c0_1, %c0_2] : memref<1x128xf32, #tpu.memory_space<vmem>>, vector<1x128xf32>
    %c0_i32 = arith.constant 0 : i32
    %2 = arith.index_cast %c0_i32 : i32 to index
    %c0_3 = arith.constant 0 : index
    %c0_4 = arith.constant 0 : index
    %3 = vector.load %arg0[%2, %c0_3, %c0_4] : memref<1x1x128xf32, #tpu.memory_space<vmem>>, vector<1x1x128xf32>
    %4 = vector.shape_cast %3 : vector<1x1x128xf32> to vector<1x128xf32>
    %5 = tpu.concatenate %4, %1 in 1 : vector<1x128xf32>, vector<1x128xf32> -> vector<1x256xf32>
    %c0_5 = arith.constant 0 : index
    %c0_6 = arith.constant 0 : index
    %6 = vector.load %arg2[%c0_5, %c0_6] : memref<256x512xf32, #tpu.memory_space<vmem>>, vector<256x512xf32>
    %cst = arith.constant dense<0.000000e+00> : vector<1x512xf32>
    %7 = tpu.matmul %5, %6, %cst {dimension_numbers = #tpu.dot_dimension_numbers<[1], [0], [0], [1], [0, 0, 1, 1], [], []>} : vector<1x256xf32>, vector<256x512xf32>, vector<1x512xf32> -> vector<1x512xf32>
    %8 = arith.addf %7, %0 : vector<1x512xf32>
    %9 = vector.extract_strided_slice %8 {offsets = [0, 0], sizes = [1, 128], strides = [1, 1]} : vector<1x512xf32> to vector<1x128xf32>
    %10 = arith.negf %9 : vector<1x128xf32>
    %11 = math.exp %10 : vector<1x128xf32>
    %cst_7 = arith.constant 1.000000e+00 : f32
    %12 = vector.broadcast %cst_7 : f32 to vector<1x128xf32>
    %13 = arith.addf %12, %11 : vector<1x128xf32>
    %14 = arith.divf %12, %13 : vector<1x128xf32>
    %15 = vector.extract_strided_slice %8 {offsets = [0, 128], sizes = [1, 128], strides = [1, 1]} : vector<1x512xf32> to vector<1x128xf32>
    %16 = arith.negf %15 : vector<1x128xf32>
    %17 = math.exp %16 : vector<1x128xf32>
    %cst_8 = arith.constant 1.000000e+00 : f32
    %18 = vector.broadcast %cst_8 : f32 to vector<1x128xf32>
    %19 = arith.addf %18, %17 : vector<1x128xf32>
    %20 = arith.divf %18, %19 : vector<1x128xf32>
    %21 = vector.extract_strided_slice %8 {offsets = [0, 256], sizes = [1, 128], strides = [1, 1]} : vector<1x512xf32> to vector<1x128xf32>
    %22 = vector.extract_strided_slice %8 {offsets = [0, 384], sizes = [1, 128], strides = [1, 1]} : vector<1x512xf32> to vector<1x128xf32>
    %23 = arith.mulf %14, %22 : vector<1x128xf32>
    %24 = arith.addf %21, %23 : vector<1x128xf32>
    %25 = math.tanh %24 : vector<1x128xf32>
    %cst_9 = arith.constant 1.000000e+00 : f32
    %26 = vector.broadcast %cst_9 : f32 to vector<1x128xf32>
    %27 = arith.subf %26, %20 : vector<1x128xf32>
    %28 = arith.mulf %27, %25 : vector<1x128xf32>
    %29 = arith.mulf %20, %1 : vector<1x128xf32>
    %30 = arith.addf %28, %29 : vector<1x128xf32>
    %31 = arith.index_cast %c0_i32 : i32 to index
    %c0_10 = arith.constant 0 : index
    %c0_11 = arith.constant 0 : index
    %32 = vector.load %arg4[%31, %c0_10, %c0_11] : memref<1x1x128xf32, #tpu.memory_space<vmem>>, vector<1x1x128xf32>
    %33 = vector.shape_cast %32 : vector<1x1x128xf32> to vector<1x128xf32>
    %34 = vector.shape_cast %30 : vector<1x128xf32> to vector<1x1x128xf32>
    tpu.vector_store %arg4[%31, %c0_10, %c0_11], %34 {strides = array<i32>} : memref<1x1x128xf32, #tpu.memory_space<vmem>>, vector<1x1x128xf32>,
    %c1_i32 = arith.constant 1 : i32
    return
  }
}

</mosaic_0001>

<llo_original>
// kernel: tpu_custom_call.1
$region0: #{tpu_custom_call.1}
  #allocation0 [shape = 'u32[]', space=smem, size = 0x4, offset = 0x4, fixed_abs, tag = 'smem constant byte address 0x4 - core index']
  #allocation1 [shape = 'u32[144,128]{1,0:T(1,128)}', space=vmem, size = 0x12000, scoped, tag = 'internal scratch']
  %s0 = inlined_call_operand.hbm [shape: f32[1,1,128], index: 0, kind: input, shape index: {}]
  %s1 = inlined_call_operand.vmem [shape: f32[1,128], index: 1, kind: input, shape index: {}]
  %s2 = inlined_call_operand.hbm [shape: f32[256,512], index: 2, kind: input, shape index: {}]
  %s3 = inlined_call_operand.vmem [shape: f32[1,512], index: 3, kind: input, shape index: {}]
  %s4 = inlined_call_operand.hbm [shape: f32[1,1,128], index: 4, kind: output, shape index: {}]
  %s5 = sld [smem:[#allocation0]]
  $region34: #{tpu_custom_call.1} parent=0
    _
  %s7 = ssub.s32 1, %s5
  %s8 = scalar_select 0, %s7, %s5
  $region1: #{tpu_custom_call.1} parent=0
    #allocation2 [shape = 'u8[512]{0}', space=vmem, size = 0x400, scoped, tag = 'input window, operand 0, single buffered']
    #allocation3 [shape = 's32[1]{0}', space=sflag, size = 0x4, scoped, tag = 'scoped memory for tpu_custom_call.1']
    #allocation4 [shape = 's32[1]{0}', space=sflag, size = 0x4, scoped, tag = 'scoped memory for tpu_custom_call.1']
    #allocation5 [shape = 'u8[524288]{0}', space=vmem, size = 0x80000, scoped, tag = 'input window, operand 2, single buffered']
    #allocation6 [shape = 's32[1]{0}', space=sflag, size = 0x4, scoped, tag = 'scoped memory for tpu_custom_call.1']
    #allocation7 [shape = 'u8[512]{0}', space=vmem, size = 0x400, scoped, tag = 'output window, operand 0, single buffered']
    %9 = vsyncpa [#allocation3], 0
    %10 = vsyncpa [#allocation6], 0
    %11 = vsyncpa [#allocation4], 0
    // Predicated region
    $region2: #{tpu_custom_call.1} parent=1 // pred_check
      _
    $region3: #{tpu_custom_call.1} parent=1 // pred_check_branch
      %13 = sbr.rel (0) target = $region5
    $region4: #{tpu_custom_call.1} parent=1 // pred_region
      %s15 = ssub.s32 16, 16
      %16 = vsyncadd [#allocation3], %s15
      %s18 = sshll.u32 [#allocation2], 4
      %s19 = int_to_ptr.vmem [resolvable:$true] %s18
      %21 = dma.hbm_to_vmem [thread:$0]  %s0, 16, %s19, [#allocation3]
    $region5: #{tpu_custom_call.1} parent=1 // pred_fallthru
      _
    // Predicated region
    $region6: #{tpu_custom_call.1} parent=1 // pred_check
      _
    $region7: #{tpu_custom_call.1} parent=1 // pred_check_branch
      %23 = sbr.rel (0) target = $region9
    $region8: #{tpu_custom_call.1} parent=1 // pred_region
      _
    $region9: #{tpu_custom_call.1} parent=1 // pred_fallthru
      _
    // Predicated region
    $region10: #{tpu_custom_call.1} parent=1 // pred_check
      _
    $region11: #{tpu_custom_call.1} parent=1 // pred_check_branch
      %25 = sbr.rel (0) target = $region13
    $region12: #{tpu_custom_call.1} parent=1 // pred_region
      %s27 = ssub.s32 16384, 16384
      %28 = vsyncadd [#allocation6], %s27
      %s29 = sshll.u32 [#allocation5], 4
      %s30 = int_to_ptr.vmem [resolvable:$true] %s29
      %35 = dma.hbm_to_vmem [thread:$0]  %s2, 16384, %s30, [#allocation6], 512, 512, 32
    $region13: #{tpu_custom_call.1} parent=1 // pred_fallthru
      _
    // Predicated region
    $region14: #{tpu_custom_call.1} parent=1 // pred_check
      _
    $region15: #{tpu_custom_call.1} parent=1 // pred_check_branch
      %37 = sbr.rel (0) target = $region17
    $region16: #{tpu_custom_call.1} parent=1 // pred_region
      _
    $region17: #{tpu_custom_call.1} parent=1 // pred_fallthru
      _
    // Predicated region
    $region18: #{tpu_custom_call.1} parent=1 // pred_check
      _
    $region19: #{tpu_custom_call.1} parent=1 // pred_check_branch
      %39 = sbr.rel (0) target = $region21
    $region20: #{tpu_custom_call.1} parent=1 // pred_region
      %40 = dma.done [#allocation3], 16
    $region21: #{tpu_custom_call.1} parent=1 // pred_fallthru
      _
    // Predicated region
    $region22: #{tpu_custom_call.1} parent=1 // pred_check
      _
    $region23: #{tpu_custom_call.1} parent=1 // pred_check_branch
      %42 = sbr.rel (0) target = $region25
    $region24: #{tpu_custom_call.1} parent=1 // pred_region
      %43 = dma.done [#allocation6], 16384
    $region25: #{tpu_custom_call.1} parent=1 // pred_fallthru
      _
    %v44 = vld [vmem:[%s3] sm:$0xf]
    %v45 = vld [vmem:[%s1] sm:$0x1]
    %v46 = vld [vmem:[#allocation2] sm:$0x1]
    %v47 = vld [vmem:[#allocation5] sm:$0xff]
    %v48 = vld [vmem:[#allocation5 + $0x8] sm:$0xff]
    %v49 = vld [vmem:[#allocation5 + $0x10] sm:$0xff]
    %v50 = vld [vmem:[#allocation5 + $0x18] sm:$0xff]
    %v51 = vld [vmem:[#allocation5 + $0x20] sm:$0xff]
    %v52 = vld [vmem:[#allocation5 + $0x28] sm:$0xff]
    %v53 = vld [vmem:[#allocation5 + $0x30] sm:$0xff]
    %v54 = vld [vmem:[#allocation5 + $0x38] sm:$0xff]
    %v55 = vld [vmem:[#allocation5 + $0x40] sm:$0xff]
    %v56 = vld [vmem:[#allocation5 + $0x48] sm:$0xff]
    %v57 = vld [vmem:[#allocation5 + $0x50] sm:$0xff]
    %v58 = vld [vmem:[#allocation5 + $0x58] sm:$0xff]
    %v59 = vld [vmem:[#allocation5 + $0x60] sm:$0xff]
    %v60 = vld [vmem:[#allocation5 + $0x68] sm:$0xff]
    %v61 = vld [vmem:[#allocation5 + $0x70] sm:$0xff]
    %v62 = vld [vmem:[#allocation5 + $0x78] sm:$0xff]
    %v63 = vld [vmem:[#allocation5 + $0x80] sm:$0xff]
    %v64 = vld [vmem:[#allocation5 + $0x88] sm:$0xff]
    %v65 = vld [vmem:[#allocation5 + $0x90] sm:$0xff]
    %v66 = vld [vmem:[#allocation5 + $0x98] sm:$0xff]
    %v67 = vld [vmem:[#allocation5 + $0xa0] sm:$0xff]
    %v68 = vld [vmem:[#allocation5 + $0xa8] sm:$0xff]
    %v69 = vld [vmem:[#allocation5 + $0xb0] sm:$0xff]
    %v70 = vld [vmem:[#allocation5 + $0xb8] sm:$0xff]
    %v71 = vld [vmem:[#allocation5 + $0xc0] sm:$0xff]
    %v72 = vld [vmem:[#allocation5 + $0xc8] sm:$0xff]
    %v73 = vld [vmem:[#allocation5 + $0xd0] sm:$0xff]
    %v74 = vld [vmem:[#allocation5 + $0xd8] sm:$0xff]
    %v75 = vld [vmem:[#allocation5 + $0xe0] sm:$0xff]
    %v76 = vld [vmem:[#allocation5 + $0xe8] sm:$0xff]
    %v77 = vld [vmem:[#allocation5 + $0xf0] sm:$0xff]
    %v78 = vld [vmem:[#allocation5 + $0xf8] sm:$0xff]
    %v79 = vld [vmem:[#allocation5 + $0x100] sm:$0xff]
    %v80 = vld [vmem:[#allocation5 + $0x108] sm:$0xff]
    %v81 = vld [vmem:[#allocation5 + $0x110] sm:$0xff]
    %v82 = vld [vmem:[#allocation5 + $0x118] sm:$0xff]
    %v83 = vld [vmem:[#allocation5 + $0x120] sm:$0xff]
    %v84 = vld [vmem:[#allocation5 + $0x128] sm:$0xff]
    %v85 = vld [vmem:[#allocation5 + $0x130] sm:$0xff]
    %v86 = vld [vmem:[#allocation5 + $0x138] sm:$0xff]
    %v87 = vld [vmem:[#allocation5 + $0x140] sm:$0xff]
    %v88 = vld [vmem:[#allocation5 + $0x148] sm:$0xff]
    %v89 = vld [vmem:[#allocation5 + $0x150] sm:$0xff]
    %v90 = vld [vmem:[#allocation5 + $0x158] sm:$0xff]
    %v91 = vld [vmem:[#allocation5 + $0x160] sm:$0xff]
    %v92 = vld [vmem:[#allocation5 + $0x168] sm:$0xff]
    %v93 = vld [vmem:[#allocation5 + $0x170] sm:$0xff]
    %v94 = vld [vmem:[#allocation5 + $0x178] sm:$0xff]
    %v95 = vld [vmem:[#allocation5 + $0x180] sm:$0xff]
    %v96 = vld [vmem:[#allocation5 + $0x188] sm:$0xff]
    %v97 = vld [vmem:[#allocation5 + $0x190] sm:$0xff]
    %v98 = vld [vmem:[#allocation5 + $0x198] sm:$0xff]
    %v99 = vld [vmem:[#allocation5 + $0x1a0] sm:$0xff]
    %v100 = vld [vmem:[#allocation5 + $0x1a8] sm:$0xff]
    %v101 = vld [vmem:[#allocation5 + $0x1b0] sm:$0xff]
    %v102 = vld [vmem:[#allocation5 + $0x1b8] sm:$0xff]
    %v103 = vld [vmem:[#allocation5 + $0x1c0] sm:$0xff]
    %v104 = vld [vmem:[#allocation5 + $0x1c8] sm:$0xff]
    %v105 = vld [vmem:[#allocation5 + $0x1d0] sm:$0xff]
    %v106 = vld [vmem:[#allocation5 + $0x1d8] sm:$0xff]
    %v107 = vld [vmem:[#allocation5 + $0x1e0] sm:$0xff]
    %v108 = vld [vmem:[#allocation5 + $0x1e8] sm:$0xff]
    %v109 = vld [vmem:[#allocation5 + $0x1f0] sm:$0xff]
    %v110 = vld [vmem:[#allocation5 + $0x1f8] sm:$0xff]
    %v111 = vld [vmem:[#allocation5 + $0x200] sm:$0xff]
    %v112 = vld [vmem:[#allocation5 + $0x208] sm:$0xff]
    %v113 = vld [vmem:[#allocation5 + $0x210] sm:$0xff]
    %v114 = vld [vmem:[#allocation5 + $0x218] sm:$0xff]
    %v115 = vld [vmem:[#allocation5 + $0x220] sm:$0xff]
    %v116 = vld [vmem:[#allocation5 + $0x228] sm:$0xff]
    %v117 = vld [vmem:[#allocation5 + $0x230] sm:$0xff]
    %v118 = vld [vmem:[#allocation5 + $0x238] sm:$0xff]
    %v119 = vld [vmem:[#allocation5 + $0x240] sm:$0xff]
    %v120 = vld [vmem:[#allocation5 + $0x248] sm:$0xff]
    %v121 = vld [vmem:[#allocation5 + $0x250] sm:$0xff]
    %v122 = vld [vmem:[#allocation5 + $0x258] sm:$0xff]
    %v123 = vld [vmem:[#allocation5 + $0x260] sm:$0xff]
    %v124 = vld [vmem:[#allocation5 + $0x268] sm:$0xff]
    %v125 = vld [vmem:[#allocation5 + $0x270] sm:$0xff]
    %v126 = vld [vmem:[#allocation5 + $0x278] sm:$0xff]
    %v127 = vld [vmem:[#allocation5 + $0x280] sm:$0xff]
    %v128 = vld [vmem:[#allocation5 + $0x288] sm:$0xff]
    %v129 = vld [vmem:[#allocation5 + $0x290] sm:$0xff]
    %v130 = vld [vmem:[#allocation5 + $0x298] sm:$0xff]
    %v131 = vld [vmem:[#allocation5 + $0x2a0] sm:$0xff]
    %v132 = vld [vmem:[#allocation5 + $0x2a8] sm:$0xff]
    %v133 = vld [vmem:[#allocation5 + $0x2b0] sm:$0xff]
    %v134 = vld [vmem:[#allocation5 + $0x2b8] sm:$0xff]
    %v135 = vld [vmem:[#allocation5 + $0x2c0] sm:$0xff]
    %v136 = vld [vmem:[#allocation5 + $0x2c8] sm:$0xff]
    %v137 = vld [vmem:[#allocation5 + $0x2d0] sm:$0xff]
    %v138 = vld [vmem:[#allocation5 + $0x2d8] sm:$0xff]
    %v139 = vld [vmem:[#allocation5 + $0x2e0] sm:$0xff]
    %v140 = vld [vmem:[#allocation5 + $0x2e8] sm:$0xff]
    %v141 = vld [vmem:[#allocation5 + $0x2f0] sm:$0xff]
    %v142 = vld [vmem:[#allocation5 + $0x2f8] sm:$0xff]
    %v143 = vld [vmem:[#allocation5 + $0x300] sm:$0xff]
    %v144 = vld [vmem:[#allocation5 + $0x308] sm:$0xff]
    %v145 = vld [vmem:[#allocation5 + $0x310] sm:$0xff]
    %v146 = vld [vmem:[#allocation5 + $0x318] sm:$0xff]
    %v147 = vld [vmem:[#allocation5 + $0x320] sm:$0xff]
    %v148 = vld [vmem:[#allocation5 + $0x328] sm:$0xff]
    %v149 = vld [vmem:[#allocation5 + $0x330] sm:$0xff]
    %v150 = vld [vmem:[#allocation5 + $0x338] sm:$0xff]
    %v151 = vld [vmem:[#allocation5 + $0x340] sm:$0xff]
    %v152 = vld [vmem:[#allocation5 + $0x348] sm:$0xff]
    %v153 = vld [vmem:[#allocation5 + $0x350] sm:$0xff]
    %v154 = vld [vmem:[#allocation5 + $0x358] sm:$0xff]
    %v155 = vld [vmem:[#allocation5 + $0x360] sm:$0xff]
    %v156 = vld [vmem:[#allocation5 + $0x368] sm:$0xff]
    %v157 = vld [vmem:[#allocation5 + $0x370] sm:$0xff]
    %v158 = vld [vmem:[#allocation5 + $0x378] sm:$0xff]
    %v159 = vld [vmem:[#allocation5 + $0x380] sm:$0xff]
    %v160 = vld [vmem:[#allocation5 + $0x388] sm:$0xff]
    %v161 = vld [vmem:[#allocation5 + $0x390] sm:$0xff]
    %v162 = vld [vmem:[#allocation5 + $0x398] sm:$0xff]
    %v163 = vld [vmem:[#allocation5 + $0x3a0] sm:$0xff]
    %v164 = vld [vmem:[#allocation5 + $0x3a8] sm:$0xff]
    %v165 = vld [vmem:[#allocation5 + $0x3b0] sm:$0xff]
    %v166 = vld [vmem:[#allocation5 + $0x3b8] sm:$0xff]
    %v167 = vld [vmem:[#allocation5 + $0x3c0] sm:$0xff]
    %v168 = vld [vmem:[#allocation5 + $0x3c8] sm:$0xff]
    %v169 = vld [vmem:[#allocation5 + $0x3d0] sm:$0xff]
    %v170 = vld [vmem:[#allocation5 + $0x3d8] sm:$0xff]
    %v171 = vld [vmem:[#allocation5 + $0x3e0] sm:$0xff]
    %v172 = vld [vmem:[#allocation5 + $0x3e8] sm:$0xff]
    %v173 = vld [vmem:[#allocation5 + $0x3f0] sm:$0xff]
    %v174 = vld [vmem:[#allocation5 + $0x3f8] sm:$0xff]
    %v176 = vlaneseq
    %v177 = vshrl.u32 %v176, 7
    %v178 = vsub.s32 0, %v177
    %v179 = vrot.slane %v44, %v178
    %v180 = vlaneseq
    %v181 = vshrl.u32 %v180, 7
    %v182 = vsub.s32 1, %v181
    %v183 = vrot.slane %v44, %v182
    %v184 = vlaneseq
    %v185 = vshrl.u32 %v184, 7
    %v186 = vsub.s32 2, %v185
    %v187 = vrot.slane %v44, %v186
    %v188 = vlaneseq
    %v189 = vshrl.u32 %v188, 7
    %v190 = vsub.s32 3, %v189
    %v191 = vrot.slane %v44, %v190
    %196 = vmatprep.subr.mxu0 %v108
    %197 = vmatpush1.msra.mxu0 %v107
    %198 = vmatprep.subr.mxu0 %v104
    %199 = vmatpush1.msra.mxu0 %v103
    %200 = vmatprep.subr.mxu0 %v100
    %201 = vmatpush1.msra.mxu0 %v99
    %202 = vmatprep.subr.mxu0 %v96
    %203 = vmatpush1.msra.mxu0 %v95
    %204 = vmatprep.subr.mxu0 %v92
    %205 = vmatpush1.msra.mxu0 %v91
    %206 = vmatprep.subr.mxu0 %v88
    %207 = vmatpush1.msra.mxu0 %v87
    %208 = vmatprep.subr.mxu0 %v84
    %209 = vmatpush1.msra.mxu0 %v83
    %210 = vmatprep.subr.mxu0 %v80
    %211 = vmatpush1.msra.mxu0 %v79
    %212 = vmatprep.subr.mxu0 %v76
    %213 = vmatpush1.msra.mxu0 %v75
    %214 = vmatprep.subr.mxu0 %v72
    %215 = vmatpush1.msra.mxu0 %v71
    %216 = vmatprep.subr.mxu0 %v68
    %217 = vmatpush1.msra.mxu0 %v67
    %218 = vmatprep.subr.mxu0 %v64
    %219 = vmatpush1.msra.mxu0 %v63
    %220 = vmatprep.subr.mxu0 %v60
    %221 = vmatpush1.msra.mxu0 %v59
    %222 = vmatprep.subr.mxu0 %v56
    %223 = vmatpush1.msra.mxu0 %v55
    %224 = vmatprep.subr.mxu0 %v52
    %225 = vmatpush1.msra.mxu0 %v51
    %226 = vmatprep.subr.mxu0 %v48
    %227 = vmatpush1.msra.mxu0 %v47
    %228 = vmatprep.subr.mxu0 %v172
    %229 = vmatpush2.msra.mxu0 %v171
    %230 = vmatprep.subr.mxu0 %v168
    %231 = vmatpush2.msra.mxu0 %v167
    %232 = vmatprep.subr.mxu0 %v164
    %233 = vmatpush2.msra.mxu0 %v163
    %234 = vmatprep.subr.mxu0 %v160
    %235 = vmatpush2.msra.mxu0 %v159
    %236 = vmatprep.subr.mxu0 %v156
    %237 = vmatpush2.msra.mxu0 %v155
    %238 = vmatprep.subr.mxu0 %v152
    %239 = vmatpush2.msra.mxu0 %v151
    %240 = vmatprep.subr.mxu0 %v148
    %241 = vmatpush2.msra.mxu0 %v147
    %242 = vmatprep.subr.mxu0 %v144
    %243 = vmatpush2.msra.mxu0 %v143
    %244 = vmatprep.subr.mxu0 %v140
    %245 = vmatpush2.msra.mxu0 %v139
    %246 = vmatprep.subr.mxu0 %v136
    %247 = vmatpush2.msra.mxu0 %v135
    %248 = vmatprep.subr.mxu0 %v132
    %249 = vmatpush2.msra.mxu0 %v131
    %250 = vmatprep.subr.mxu0 %v128
    %251 = vmatpush2.msra.mxu0 %v127
    %252 = vmatprep.subr.mxu0 %v124
    %253 = vmatpush2.msra.mxu0 %v123
    %254 = vmatprep.subr.mxu0 %v120
    %255 = vmatpush2.msra.mxu0 %v119
    %256 = vmatprep.subr.mxu0 %v116
    %257 = vmatpush2.msra.mxu0 %v115
    %258 = vmatprep.subr.mxu0 %v112
    %259 = vmatpush2.msra.mxu0 %v111
    %260 = vmatprep.mubr.f32.mxu0 %v45
    %261 = vmatmul.mubr.f32.gmra.mxu0 %v46
    %v262 = vpop.f32.mrf.mxu0
    %v263 = vadd.f32 %v179, %v262
    %v264 = vpop.f32.mrf.mxu0
    %v265 = vadd.f32 %v183, %v264
    %266 = vdwg.mxu0
    %267 = vmatprep.subr.mxu0 %v110
    %268 = vmatpush1.msra.mxu0 %v109
    %269 = vmatprep.subr.mxu0 %v106
    %270 = vmatpush1.msra.mxu0 %v105
    %271 = vmatprep.subr.mxu0 %v102
    %272 = vmatpush1.msra.mxu0 %v101
    %273 = vmatprep.subr.mxu0 %v98
    %274 = vmatpush1.msra.mxu0 %v97
    %275 = vmatprep.subr.mxu0 %v94
    %276 = vmatpush1.msra.mxu0 %v93
    %277 = vmatprep.subr.mxu0 %v90
    %278 = vmatpush1.msra.mxu0 %v89
    %279 = vmatprep.subr.mxu0 %v86
    %280 = vmatpush1.msra.mxu0 %v85
    %281 = vmatprep.subr.mxu0 %v82
    %282 = vmatpush1.msra.mxu0 %v81
    %283 = vmatprep.subr.mxu0 %v78
    %284 = vmatpush1.msra.mxu0 %v77
    %285 = vmatprep.subr.mxu0 %v74
    %286 = vmatpush1.msra.mxu0 %v73
    %287 = vmatprep.subr.mxu0 %v70
    %288 = vmatpush1.msra.mxu0 %v69
    %289 = vmatprep.subr.mxu0 %v66
    %290 = vmatpush1.msra.mxu0 %v65
    %291 = vmatprep.subr.mxu0 %v62
    %292 = vmatpush1.msra.mxu0 %v61
    %293 = vmatprep.subr.mxu0 %v58
    %294 = vmatpush1.msra.mxu0 %v57
    %295 = vmatprep.subr.mxu0 %v54
    %296 = vmatpush1.msra.mxu0 %v53
    %297 = vmatprep.subr.mxu0 %v50
    %298 = vmatpush1.msra.mxu0 %v49
    %299 = vmatprep.subr.mxu0 %v174
    %300 = vmatpush2.msra.mxu0 %v173
    %301 = vmatprep.subr.mxu0 %v170
    %302 = vmatpush2.msra.mxu0 %v169
    %303 = vmatprep.subr.mxu0 %v166
    %304 = vmatpush2.msra.mxu0 %v165
    %305 = vmatprep.subr.mxu0 %v162
    %306 = vmatpush2.msra.mxu0 %v161
    %307 = vmatprep.subr.mxu0 %v158
    %308 = vmatpush2.msra.mxu0 %v157
    %309 = vmatprep.subr.mxu0 %v154
    %310 = vmatpush2.msra.mxu0 %v153
    %311 = vmatprep.subr.mxu0 %v150
    %312 = vmatpush2.msra.mxu0 %v149
    %313 = vmatprep.subr.mxu0 %v146
    %314 = vmatpush2.msra.mxu0 %v145
    %315 = vmatprep.subr.mxu0 %v142
    %316 = vmatpush2.msra.mxu0 %v141
    %317 = vmatprep.subr.mxu0 %v138
    %318 = vmatpush2.msra.mxu0 %v137
    %319 = vmatprep.subr.mxu0 %v134
    %320 = vmatpush2.msra.mxu0 %v133
    %321 = vmatprep.subr.mxu0 %v130
    %322 = vmatpush2.msra.mxu0 %v129
    %323 = vmatprep.subr.mxu0 %v126
    %324 = vmatpush2.msra.mxu0 %v125
    %325 = vmatprep.subr.mxu0 %v122
    %326 = vmatpush2.msra.mxu0 %v121
    %327 = vmatprep.subr.mxu0 %v118
    %328 = vmatpush2.msra.mxu0 %v117
    %329 = vmatprep.subr.mxu0 %v114
    %330 = vmatpush2.msra.mxu0 %v113
    %331 = vmatprep.mubr.f32.mxu0 %v45
    %332 = vmatmul.mubr.f32.gmra.mxu0 %v46
    %v333 = vpop.f32.mrf.mxu0
    %v334 = vadd.f32 %v187, %v333
    %v335 = vpop.f32.mrf.mxu0
    %v336 = vadd.f32 %v191, %v335
    %337 = vdwg.mxu0
    %v338 = vxor.u32 %v263, 2147483648
    %v339 = vmul.f32 %v338, 1.442695
    %v340 = vpow.pop %v339
    %v341 = vadd.f32 %v340, 1.0
    %v342 = vrcp.pop %v341
    %v343 = vmul.f32 1.0, %v342
    %v344 = vxor.u32 %v265, 2147483648
    %v345 = vmul.f32 %v344, 1.442695
    %v346 = vpow.pop %v345
    %v347 = vadd.f32 %v346, 1.0
    %v348 = vrcp.pop %v347
    %v349 = vmul.f32 1.0, %v348
    %v350 = vmul.f32 %v343, %v336
    %v351 = vadd.f32 %v334, %v350
    %v352 = vtanh.pop %v351
    %v353 = vsub.f32 1.0, %v349
    %v354 = vmul.f32 %v353, %v352
    %v355 = vmul.f32 %v349, %v45
    %v356 = vadd.f32 %v354, %v355
    %357 = vst [vmem:[#allocation7] sm:$0x1] %v356
    // Predicated region
    $region26: #{tpu_custom_call.1} parent=1 // pred_check
      _
    $region27: #{tpu_custom_call.1} parent=1 // pred_check_branch
      %359 = sbr.rel (0) target = $region29
    $region28: #{tpu_custom_call.1} parent=1 // pred_region
      %s361 = ssub.s32 16, 16
      %362 = vsyncadd [#allocation4], %s361
      %s364 = sshll.u32 [#allocation7], 4
      %s365 = int_to_ptr.vmem [resolvable:$true] %s364
      %367 = dma.vmem_to_hbm [thread:$0]  %s365, 16, %s4, [#allocation4]
    $region29: #{tpu_custom_call.1} parent=1 // pred_fallthru
      _
    // Predicated region
    $region30: #{tpu_custom_call.1} parent=1 // pred_check
      _
    $region31: #{tpu_custom_call.1} parent=1 // pred_check_branch
      %369 = sbr.rel (0) target = $region33
    $region32: #{tpu_custom_call.1} parent=1 // pred_region
      %370 = dma.done [#allocation4], 16
    $region33: #{tpu_custom_call.1} parent=1 // pred_fallthru
      _
    %371 = vsyncpa [#allocation3], 1
    %372 = vsyncpa [#allocation6], 1
    %373 = vsyncpa [#allocation4], 1

</llo_original>
